<compile_context>
chip_gen: v7x
topology: tpu7x:2x2x1
jax: 0.10.0
libtpu: 0.0.40
codegen_flags: <defaults>
</compile_context>

<pallas_src>
import functools

import jax
import jax.numpy as jnp
from jax import lax
from jax.experimental import pallas as pl
from jax.experimental.pallas import tpu as pltpu


# ---------------------------------------------------------------------------
# Fused single-pass kernel (batch-blocked): the common case.
# ---------------------------------------------------------------------------
def _se_fused_kernel(x_ref, w1_ref, b1_ref, w2_ref, b2_ref, o_ref, *, inv_l):
    # Squeeze: f32 sum over the lane (L) axis. The f32 widen is consumed by
    # the reduction and is NOT kept live across the matmuls below.
    se = jnp.sum(x_ref[...].astype(jnp.float32), axis=-1) * inv_l     # (bb, C)

    # Excite: tiny MLP in f32 (MXU) + relu / sigmoid (EUP).
    h = jnp.dot(se, w1_ref[...], preferred_element_type=jnp.float32)
    h = jnp.maximum(h + b1_ref[...], 0.0)                             # (bb, H)
    z = jnp.dot(h, w2_ref[...], preferred_element_type=jnp.float32)
    gate = jax.nn.sigmoid(z + b2_ref[...])                            # (bb, C)

    # Scale: re-read x (VMEM-resident, no extra HBM traffic) and multiply in
    # the I/O dtype — bf16 VALU on v6e/v7x halves the elementwise work; for
    # f32 I/O this is the exact original math. Single lane-dense store.
    o_ref[...] = x_ref[...] * gate[:, :, None].astype(o_ref.dtype)


# ---------------------------------------------------------------------------
# Two-pass L-tiled fallback (single sample too large for VMEM, e.g. v7x).
# ---------------------------------------------------------------------------
def _se_sum_kernel(x_ref, s_ref, *, true_l, tile_l):
    li = pl.program_id(1)

    @pl.when(li == 0)
    def _():
        s_ref[...] = jnp.zeros_like(s_ref)

    xt = x_ref[...].astype(jnp.float32)                   # (1, C, tile_l)
    if true_l % tile_l != 0:
        # Ragged final L tile: OOB lanes hold garbage -> mask them to zero.
        lane = lax.broadcasted_iota(jnp.int32, xt.shape, 2)
        xt = jnp.where(li * tile_l + lane < true_l, xt, 0.0)
    s_ref[...] += jnp.sum(xt, axis=-1, keepdims=True)     # (1, C, 1) f32


def _se_scale_kernel(g_ref, x_ref, o_ref):
    # g_ref: (1, C, 1) f32 gate, x_ref/o_ref: (1, C, tile_l) in the I/O dtype.
    o_ref[...] = x_ref[...] * g_ref[...].astype(o_ref.dtype)


# ---------------------------------------------------------------------------
# Sizing helpers.
# ---------------------------------------------------------------------------
def _vmem_budget():
    """Generation-aware (stream_budget_bytes, vmem_limit_bytes)."""
    try:
        cap = int(getattr(pltpu.get_tpu_info(), "vmem_capacity_bytes", 0))
    except Exception:  # pragma: no cover - info query unavailable
        cap = 0
    if cap <= 0:
        cap = 64 * 1024 * 1024           # conservative: covers v7x's 64 MiB
    stream_budget = (cap * 3) // 8       # v5e/v6e: 48 MiB, v7x: 24 MiB
    vmem_limit = min(cap, stream_budget + (16 << 20))
    return stream_budget, vmem_limit


def _pick_batch_block(batch, per_sample_bytes, stream_budget, min_steps=4):
    """Largest batch block that fits the stream budget, keeping a few grid
    steps for pipelining and preferring an even step count (v7x 2 TCs)."""
    cap = max(1, stream_budget // per_sample_bytes)
    bb = min(batch, cap)
    steps = -(-batch // bb)
    if steps < min_steps <= batch:
        steps = min_steps
    if steps > 1 and steps % 2:
        steps += 1
    return max(1, min(cap, -(-batch // steps)))


# ---------------------------------------------------------------------------
# Wrappers.
# ---------------------------------------------------------------------------
def _se_fused(x, w1_t, b1_r, w2_t, b2_r, *, bb, vmem_limit):
    B, C, L = x.shape
    H = w1_t.shape[1]
    itemsize = jnp.dtype(x.dtype).itemsize

    cost = pl.CostEstimate(
        flops=4 * B * C * H + 2 * B * C * L,
        transcendentals=B * C,
        bytes_accessed=2 * B * C * L * itemsize + 4 * (2 * C * H + C + H),
    )
    const = lambda shape: pl.BlockSpec(shape, lambda i: (0, 0))

    return pl.pallas_call(
        functools.partial(_se_fused_kernel, inv_l=1.0 / L),
        out_shape=jax.ShapeDtypeStruct((B, C, L), x.dtype),
        grid=(pl.cdiv(B, bb),),
        in_specs=[
            pl.BlockSpec((bb, C, L), lambda i: (i, 0, 0)),   # streamed x
            const((C, H)),                                   # resident weights
            const((1, H)),
            const((H, C)),
            const((1, C)),
        ],
        out_specs=pl.BlockSpec((bb, C, L), lambda i: (i, 0, 0)),
        compiler_params=pltpu.CompilerParams(
            dimension_semantics=("parallel",),
            vmem_limit_bytes=vmem_limit,
        ),
        cost_estimate=cost,
    )(x, w1_t, b1_r, w2_t, b2_r)


def _se_two_pass(x, w1_t, b1_r, w2_t, b2_r, *, tile_l, vmem_limit):
    """L-tiled path for samples too large to hold (C, L) in VMEM at once."""
    B, C, L = x.shape
    itemsize = jnp.dtype(x.dtype).itemsize
    nl = pl.cdiv(L, tile_l)

    # Pass 1: f32 channel sums, accumulated across L tiles.
    sums = pl.pallas_call(
        functools.partial(_se_sum_kernel, true_l=L, tile_l=tile_l),
        out_shape=jax.ShapeDtypeStruct((B, C, 1), jnp.float32),
        grid=(B, nl),
        in_specs=[pl.BlockSpec((1, C, tile_l), lambda b, l: (b, 0, l))],
        out_specs=pl.BlockSpec((1, C, 1), lambda b, l: (b, 0, 0)),
        compiler_params=pltpu.CompilerParams(
            dimension_semantics=("parallel", "arbitrary"),
            vmem_limit_bytes=vmem_limit,
        ),
        cost_estimate=pl.CostEstimate(
            flops=B * C * L, transcendentals=0,
            bytes_accessed=B * C * L * itemsize + 4 * B * C),
    )(x)

    # Tiny MLP on (B, C) — negligible, keep in plain JAX.
    se = sums[:, :, 0] * (1.0 / L)
    h = jax.nn.relu(se @ w1_t + b1_r)
    gate = jax.nn.sigmoid(h @ w2_t + b2_r)[:, :, None]     # (B, C, 1) f32

    # Pass 2: stream x again and apply the gate.
    return pl.pallas_call(
        _se_scale_kernel,
        out_shape=jax.ShapeDtypeStruct((B, C, L), x.dtype),
        grid=(B, nl),
        in_specs=[pl.BlockSpec((1, C, 1), lambda b, l: (b, 0, 0)),
                  pl.BlockSpec((1, C, tile_l), lambda b, l: (b, 0, l))],
        out_specs=pl.BlockSpec((1, C, tile_l), lambda b, l: (b, 0, l)),
        compiler_params=pltpu.CompilerParams(
            dimension_semantics=("parallel", "parallel"),
            vmem_limit_bytes=vmem_limit,
        ),
        cost_estimate=pl.CostEstimate(
            flops=B * C * L, transcendentals=0,
            bytes_accessed=2 * B * C * L * itemsize + 4 * B * C),
    )(gate, x)


def squeeze_excite_block(x, w1, b1, w2, b2):
    """x: (B, C, L), any float dtype (preserved for I/O). PyTorch nn.Linear
    weights: w1: (H, C), b1: (H,), w2: (C, H), b2: (C,) with H = C // r."""
    B, C, L = x.shape
    H = w1.shape[0]
    itemsize = jnp.dtype(x.dtype).itemsize

    # Pre-transpose weights to (in, out); f32 for the in-kernel math.
    w1_t = jnp.asarray(w1, jnp.float32).T          # (C, H)
    w2_t = jnp.asarray(w2, jnp.float32).T          # (H, C)
    b1_r = jnp.asarray(b1, jnp.float32).reshape(1, H)
    b2_r = jnp.asarray(b2, jnp.float32).reshape(1, C)

    stream_budget, vmem_limit = _vmem_budget()
    c_pad = -(-C // 8) * 8
    l_pad = -(-L // 128) * 128
    # Per-sample VMEM footprint: 2 streams (x, out) x double-buffered in the
    # I/O dtype + one block-sized f32 temporary inside the kernel body.
    per_sample = c_pad * l_pad * (4 * itemsize + 4)

    if per_sample <= stream_budget:
        bb = _pick_batch_block(B, per_sample, stream_budget)
        return _se_fused(x, w1_t, b1_r, w2_t, b2_r, bb=bb, vmem_limit=vmem_limit)

    # Single sample exceeds the budget (large C*L, most relevant on v7x).
    per_lane_col = c_pad * (4 * itemsize + 4)
    tile_l = max(128, (stream_budget // per_lane_col) // 128 * 128)
    tile_l = min(tile_l, l_pad)
    return _se_two_pass(x, w1_t, b1_r, w2_t, b2_r,
                        tile_l=tile_l, vmem_limit=vmem_limit)


def _reference(x, w1, b1, w2, b2):
    xf = x.astype(jnp.float32)
    se = jnp.mean(xf, axis=-1)
    se = jax.nn.relu(se @ w1.T + b1)
    se = jax.nn.sigmoid(se @ w2.T + b2)
    return xf * se[:, :, None]


if __name__ == "__main__":
    B, C, reduction = 2, 32, 16
    H = C // reduction

    key = jax.random.PRNGKey(0)
    kx, k1, k2, k3, k4, kx2 = jax.random.split(key, 6)

    bound1 = 1.0 / (C ** 0.5)
    bound2 = 1.0 / (H ** 0.5)
    w1 = jax.random.uniform(k1, (H, C), jnp.float32, -bound1, bound1)
    b1 = jax.random.uniform(k2, (H,), jnp.float32, -bound1, bound1)
    w2 = jax.random.uniform(k3, (C, H), jnp.float32, -bound2, bound2)
    b2 = jax.random.uniform(k4, (C,), jnp.float32, -bound2, bound2)

    # f32 path (matches the PyTorch module exactly).
    L = 16
    x = jax.random.normal(kx, (B, C, L), dtype=jnp.float32)
    out = jax.block_until_ready(squeeze_excite_block(x, w1, b1, w2, b2))
    ref = _reference(x, w1, b1, w2, b2)
    assert out.shape == (B, C, L) and out.dtype == x.dtype
    assert jnp.allclose(out, ref, atol=1e-5, rtol=1e-5), "f32 mismatch"

    # bf16 I/O (gate multiply runs in bf16 inside the kernel).
    xb = x.astype(jnp.bfloat16)
    outb = jax.block_until_ready(squeeze_excite_block(xb, w1, b1, w2, b2))
    refb = _reference(xb, w1, b1, w2, b2)
    assert outb.dtype == jnp.bfloat16
    assert jnp.allclose(outb.astype(jnp.float32), refb, atol=5e-2, rtol=5e-2), \
        "bf16 mismatch"

    # Ragged L (not a multiple of 128): fused path, full-L blocks, no pad/slice.
    L2 = 200
    x2 = jax.random.normal(kx2, (B, C, L2), dtype=jnp.float32)
    out2 = jax.block_until_ready(squeeze_excite_block(x2, w1, b1, w2, b2))
    ref2 = _reference(x2, w1, b1, w2, b2)
    assert jnp.allclose(out2, ref2, atol=1e-5, rtol=1e-5), "ragged-L mismatch"

    # Exercise the L-tiled two-pass fallback directly (the path large C*L on
    # v7x takes), including the masked ragged last L tile.
    w1_t = jnp.asarray(w1, jnp.float32).T
    w2_t = jnp.asarray(w2, jnp.float32).T
    b1_r = jnp.asarray(b1, jnp.float32).reshape(1, H)
    b2_r = jnp.asarray(b2, jnp.float32).reshape(1, C)
    out3 = jax.block_until_ready(
        _se_two_pass(x2, w1_t, b1_r, w2_t, b2_r,
                     tile_l=128, vmem_limit=64 * 1024 * 1024))
    assert jnp.allclose(out3, ref2, atol=1e-5, rtol=1e-5), "two-pass mismatch"

    print("KERNEL_OK")
</pallas_src>

<mosaic_0001>
module attributes {stable_mosaic.version = 11 : i64} {
  func.func @_se_fused_kernel(%arg0: i32, %arg1: memref<2x32x16xf32, #tpu.memory_space<vmem>>, %arg2: memref<32x2xf32, #tpu.memory_space<vmem>>, %arg3: memref<1x2xf32, #tpu.memory_space<vmem>>, %arg4: memref<2x32xf32, #tpu.memory_space<vmem>>, %arg5: memref<1x32xf32, #tpu.memory_space<vmem>>, %arg6: memref<2x32x16xf32, #tpu.memory_space<vmem>>) attributes {dimension_semantics = [#tpu.dimension_semantics<parallel>], iteration_bounds = array<i64: 1>, scalar_prefetch = 0 : i64, scratch_operands = 0 : i64, tpu.core_type = #tpu.core_type<tc>, window_params = [{transform_indices = @transform_0, window_bounds = array<i64: 2, 32, 16>}, {pipeline_mode = #tpu.pipeline_mode<synchronous>, transform_indices = @transform_1, window_bounds = array<i64: 32, 2>}, {pipeline_mode = #tpu.pipeline_mode<synchronous>, transform_indices = @transform_2, window_bounds = array<i64: 1, 2>}, {pipeline_mode = #tpu.pipeline_mode<synchronous>, transform_indices = @transform_3, window_bounds = array<i64: 2, 32>}, {pipeline_mode = #tpu.pipeline_mode<synchronous>, transform_indices = @transform_4, window_bounds = array<i64: 1, 32>}, {transform_indices = @transform_5, window_bounds = array<i64: 2, 32, 16>}]} {
    %c0 = arith.constant 0 : index
    %c0_0 = arith.constant 0 : index
    %c0_1 = arith.constant 0 : index
    %0 = vector.load %arg1[%c0, %c0_0, %c0_1] : memref<2x32x16xf32, #tpu.memory_space<vmem>>, vector<2x32x16xf32>
    %cst = arith.constant dense<0.000000e+00> : vector<2x32xf32>
    %1 = vector.multi_reduction <add>, %0, %cst [2] : vector<2x32x16xf32> to vector<2x32xf32>
    %cst_2 = arith.constant 6.250000e-02 : f32
    %2 = vector.broadcast %cst_2 : f32 to vector<2x32xf32>
    %3 = arith.mulf %1, %2 : vector<2x32xf32>
    %c0_3 = arith.constant 0 : index
    %c0_4 = arith.constant 0 : index
    %4 = vector.load %arg2[%c0_3, %c0_4] : memref<32x2xf32, #tpu.memory_space<vmem>>, vector<32x2xf32>
    %cst_5 = arith.constant dense<0.000000e+00> : vector<2x2xf32>
    %5 = tpu.matmul %3, %4, %cst_5 {dimension_numbers = #tpu.dot_dimension_numbers<[1], [0], [0], [1], [0, 0, 1, 1], [], []>} : vector<2x32xf32>, vector<32x2xf32>, vector<2x2xf32> -> vector<2x2xf32>
    %c0_6 = arith.constant 0 : index
    %c0_7 = arith.constant 0 : index
    %6 = vector.load %arg3[%c0_6, %c0_7] : memref<1x2xf32, #tpu.memory_space<vmem>>, vector<1x2xf32>
    %7 = vector.broadcast %6 : vector<1x2xf32> to vector<2x2xf32>
    %8 = arith.addf %5, %7 : vector<2x2xf32>
    %cst_8 = arith.constant 0.000000e+00 : f32
    %9 = vector.broadcast %cst_8 : f32 to vector<2x2xf32>
    %10 = arith.maximumf %8, %9 : vector<2x2xf32>
    %c0_9 = arith.constant 0 : index
    %c0_10 = arith.constant 0 : index
    %11 = vector.load %arg4[%c0_9, %c0_10] : memref<2x32xf32, #tpu.memory_space<vmem>>, vector<2x32xf32>
    %cst_11 = arith.constant dense<0.000000e+00> : vector<2x32xf32>
    %12 = tpu.matmul %10, %11, %cst_11 {dimension_numbers = #tpu.dot_dimension_numbers<[1], [0], [0], [1], [0, 0, 1, 1], [], []>} : vector<2x2xf32>, vector<2x32xf32>, vector<2x32xf32> -> vector<2x32xf32>
    %c0_12 = arith.constant 0 : index
    %c0_13 = arith.constant 0 : index
    %13 = vector.load %arg5[%c0_12, %c0_13] : memref<1x32xf32, #tpu.memory_space<vmem>>, vector<1x32xf32>
    %14 = vector.broadcast %13 : vector<1x32xf32> to vector<2x32xf32>
    %15 = arith.addf %12, %14 : vector<2x32xf32>
    %16 = arith.negf %15 : vector<2x32xf32>
    %17 = math.exp %16 : vector<2x32xf32>
    %cst_14 = arith.constant 1.000000e+00 : f32
    %18 = vector.broadcast %cst_14 : f32 to vector<2x32xf32>
    %19 = arith.addf %18, %17 : vector<2x32xf32>
    %20 = arith.divf %18, %19 : vector<2x32xf32>
    %c0_15 = arith.constant 0 : index
    %c0_16 = arith.constant 0 : index
    %c0_17 = arith.constant 0 : index
    %21 = vector.load %arg1[%c0_15, %c0_16, %c0_17] : memref<2x32x16xf32, #tpu.memory_space<vmem>>, vector<2x32x16xf32>
    %22 = vector.shape_cast %20 : vector<2x32xf32> to vector<2x32x1xf32>
    %23 = vector.broadcast %22 : vector<2x32x1xf32> to vector<2x32x16xf32>
    %24 = arith.mulf %21, %23 : vector<2x32x16xf32>
    %c0_18 = arith.constant 0 : index
    %c0_19 = arith.constant 0 : index
    %c0_20 = arith.constant 0 : index
    %25 = vector.load %arg6[%c0_18, %c0_19, %c0_20] : memref<2x32x16xf32, #tpu.memory_space<vmem>>, vector<2x32x16xf32>
    tpu.vector_store %arg6[%c0_18, %c0_19, %c0_20], %24 {strides = array<i32>} : memref<2x32x16xf32, #tpu.memory_space<vmem>>, vector<2x32x16xf32>,
    return
  }
  func.func @transform_0(%arg0: i32) -> (i32, i32, i32) {
    %c0_i32 = arith.constant 0 : i32
    %c0_i32_0 = arith.constant 0 : i32
    %c0_i32_1 = arith.constant 0 : i32
    return %arg0, %c0_i32, %c0_i32_0 : i32, i32, i32
  }
  func.func @transform_1(%arg0: i32) -> (i32, i32) {
    %c0_i32 = arith.constant 0 : i32
    %c0_i32_0 = arith.constant 0 : i32
    %c0_i32_1 = arith.constant 0 : i32
    return %c0_i32, %c0_i32_0 : i32, i32
  }
  func.func @transform_2(%arg0: i32) -> (i32, i32) {
    %c0_i32 = arith.constant 0 : i32
    %c0_i32_0 = arith.constant 0 : i32
    %c0_i32_1 = arith.constant 0 : i32
    return %c0_i32, %c0_i32_0 : i32, i32
  }
  func.func @transform_3(%arg0: i32) -> (i32, i32) {
    %c0_i32 = arith.constant 0 : i32
    %c0_i32_0 = arith.constant 0 : i32
    %c0_i32_1 = arith.constant 0 : i32
    return %c0_i32, %c0_i32_0 : i32, i32
  }
  func.func @transform_4(%arg0: i32) -> (i32, i32) {
    %c0_i32 = arith.constant 0 : i32
    %c0_i32_0 = arith.constant 0 : i32
    %c0_i32_1 = arith.constant 0 : i32
    return %c0_i32, %c0_i32_0 : i32, i32
  }
  func.func @transform_5(%arg0: i32) -> (i32, i32, i32) {
    %c0_i32 = arith.constant 0 : i32
    %c0_i32_0 = arith.constant 0 : i32
    %c0_i32_1 = arith.constant 0 : i32
    return %arg0, %c0_i32, %c0_i32_0 : i32, i32, i32
  }
}

</mosaic_0001>

<llo_original>
// kernel: tpu_custom_call.1
$region0: #{tpu_custom_call.1}
  #allocation0 [shape = 'u32[]', space=smem, size = 0x4, offset = 0x4, fixed_abs, tag = 'smem constant byte address 0x4 - core index']
  #allocation1 [shape = 'u32[144,128]{1,0:T(1,128)}', space=vmem, size = 0x12000, scoped, tag = 'internal scratch']
  %s0 = inlined_call_operand.vmem [shape: f32[2,32,16], index: 0, kind: input, shape index: {}]
  %s1 = inlined_call_operand.vmem [shape: f32[32,2], index: 1, kind: input, shape index: {}]
  %s2 = inlined_call_operand.vmem [shape: f32[1,2], index: 2, kind: input, shape index: {}]
  %s3 = inlined_call_operand.vmem [shape: f32[2,32], index: 3, kind: input, shape index: {}]
  %s4 = inlined_call_operand.vmem [shape: f32[1,32], index: 4, kind: input, shape index: {}]
  %s5 = inlined_call_operand.vmem [shape: f32[2,32,16], index: 5, kind: output, shape index: {}]
  %s6 = sld [smem:[#allocation0]]
  $region30: #{tpu_custom_call.1} parent=0
    _
  %s8 = ssub.s32 1, %s6
  %s9 = scalar_select 0, %s8, %s6
  // Predicated region
  $region2: #{tpu_custom_call.1} parent=0 // pred_check
    _
  $region3: #{tpu_custom_call.1} parent=0 // pred_check_branch
    %11 = sbr.rel (0) target = $region5
  $region4: #{tpu_custom_call.1} parent=0 // pred_region
    _
  $region5: #{tpu_custom_call.1} parent=0 // pred_fallthru
    _
  // Predicated region
  $region6: #{tpu_custom_call.1} parent=0 // pred_check
    _
  $region7: #{tpu_custom_call.1} parent=0 // pred_check_branch
    %13 = sbr.rel (0) target = $region9
  $region8: #{tpu_custom_call.1} parent=0 // pred_region
    _
  $region9: #{tpu_custom_call.1} parent=0 // pred_fallthru
    _
  // Predicated region
  $region10: #{tpu_custom_call.1} parent=0 // pred_check
    _
  $region11: #{tpu_custom_call.1} parent=0 // pred_check_branch
    %15 = sbr.rel (0) target = $region13
  $region12: #{tpu_custom_call.1} parent=0 // pred_region
    _
  $region13: #{tpu_custom_call.1} parent=0 // pred_fallthru
    _
  // Predicated region
  $region14: #{tpu_custom_call.1} parent=0 // pred_check
    _
  $region15: #{tpu_custom_call.1} parent=0 // pred_check_branch
    %17 = sbr.rel (0) target = $region17
  $region16: #{tpu_custom_call.1} parent=0 // pred_region
    _
  $region17: #{tpu_custom_call.1} parent=0 // pred_fallthru
    _
  // Predicated region
  $region18: #{tpu_custom_call.1} parent=0 // pred_check
    _
  $region19: #{tpu_custom_call.1} parent=0 // pred_check_branch
    %19 = sbr.rel (0) target = $region21
  $region20: #{tpu_custom_call.1} parent=0 // pred_region
    _
  $region21: #{tpu_custom_call.1} parent=0 // pred_fallthru
    _
  %v20 = vld [vmem:[%s0] sm:$0xff]
  %v21 = vld [vmem:[%s0 + $0x8] sm:$0xff]
  %v22 = vld [vmem:[%s0 + $0x10] sm:$0xff]
  %v23 = vld [vmem:[%s0 + $0x18] sm:$0xff]
  %v24 = vld [vmem:[%s0 + $0x20] sm:$0xff]
  %v25 = vld [vmem:[%s0 + $0x28] sm:$0xff]
  %v26 = vld [vmem:[%s0 + $0x30] sm:$0xff]
  %v27 = vld [vmem:[%s0 + $0x38] sm:$0xff]
  %vm28 = vcmask 130048
  %v29 = vsel %vm28, %v20, 0.0
  %30 = vadd.xlane.f32.xlu0 %v29
  %v31 = vpop.xlane.xlu0 %30
  %v32 = vsel %vm28, %v21, 0.0
  %33 = vadd.xlane.f32.xlu0 %v32
  %v34 = vpop.xlane.xlu0 %33
  %v35 = vsel %vm28, %v22, 0.0
  %36 = vadd.xlane.f32.xlu0 %v35
  %v37 = vpop.xlane.xlu0 %36
  %v38 = vsel %vm28, %v23, 0.0
  %39 = vadd.xlane.f32.xlu0 %v38
  %v40 = vpop.xlane.xlu0 %39
  %v41 = vsel %vm28, %v24, 0.0
  %42 = vadd.xlane.f32.xlu0 %v41
  %v43 = vpop.xlane.xlu0 %42
  %v44 = vsel %vm28, %v25, 0.0
  %45 = vadd.xlane.f32.xlu0 %v44
  %v46 = vpop.xlane.xlu0 %45
  %v47 = vsel %vm28, %v26, 0.0
  %48 = vadd.xlane.f32.xlu0 %v47
  %v49 = vpop.xlane.xlu0 %48
  %v50 = vsel %vm28, %v27, 0.0
  %51 = vadd.xlane.f32.xlu0 %v50
  %v52 = vpop.xlane.xlu0 %51
  %v53 = vmul.f32 %v31, 0.0625
  %v54 = vmul.f32 %v34, 0.0625
  %v55 = vmul.f32 %v37, 0.0625
  %v56 = vmul.f32 %v40, 0.0625
  %v57 = vmul.f32 %v43, 0.0625
  %v58 = vmul.f32 %v46, 0.0625
  %v59 = vmul.f32 %v49, 0.0625
  %v60 = vmul.f32 %v52, 0.0625
  %v61 = vld [vmem:[%s1] sm:$0xff]
  %v62 = vld [vmem:[%s1 + $0x8] sm:$0xff]
  %v63 = vld [vmem:[%s1 + $0x10] sm:$0xff]
  %v64 = vld [vmem:[%s1 + $0x18] sm:$0xff]
  %v65 = vld [vmem:[%s2] sm:$0x1]
  %v67 = vlaneseq
  %v68 = vshrl.u32 %v67, 7
  %v69 = vsub.s32 0, %v68
  %v70 = vrot.slane %v65, %v69
  %v80 = vlaneseq
  %v81 = vand.u32 %v80, 127
  %v82 = vlaneseq
  %v83 = vshrl.u32 %v82, 7
  %v84 = vsub.s32 %v81, %v83
  %v85 = vrot.slane %v53, %v84
  %v86 = vadd.s32 %v81, 4294967288
  %v87 = vlaneseq
  %v88 = vshrl.u32 %v87, 7
  %v89 = vsub.s32 %v86, %v88
  %v90 = vrot.slane %v54, %v89
  %vm91 = vcmask 130112
  %v92 = vsel %vm91, %v90, %v85
  %v93 = vadd.s32 %v81, 4294967280
  %v94 = vlaneseq
  %v95 = vshrl.u32 %v94, 7
  %v96 = vsub.s32 %v93, %v95
  %v97 = vrot.slane %v55, %v96
  %vm98 = vcmask 195712
  %v99 = vsel %vm98, %v97, %v92
  %v100 = vadd.s32 %v81, 4294967272
  %v101 = vlaneseq
  %v102 = vshrl.u32 %v101, 7
  %v103 = vsub.s32 %v100, %v102
  %v104 = vrot.slane %v56, %v103
  %vm105 = vcmask 261312
  %v106 = vsel %vm105, %v104, %v99
  %v107 = vlaneseq
  %v108 = vshrl.u32 %v107, 7
  %v109 = vsub.s32 %v81, %v108
  %v110 = vrot.slane %v57, %v109
  %v111 = vlaneseq
  %v112 = vshrl.u32 %v111, 7
  %v113 = vsub.s32 %v86, %v112
  %v114 = vrot.slane %v58, %v113
  %v115 = vsel %vm91, %v114, %v110
  %v116 = vlaneseq
  %v117 = vshrl.u32 %v116, 7
  %v118 = vsub.s32 %v93, %v117
  %v119 = vrot.slane %v59, %v118
  %v120 = vsel %vm98, %v119, %v115
  %v121 = vlaneseq
  %v122 = vshrl.u32 %v121, 7
  %v123 = vsub.s32 %v100, %v122
  %v124 = vrot.slane %v60, %v123
  %v125 = vsel %vm105, %v124, %v120
  %vm126 = vcmask 1041409
  %v127 = vsel %vm126, %v125, %v106
  %vm128 = vcmask 261120
  %v129 = vsel %vm128, %v127, 0
  %131 = vmatprep.subr.mxu0 0.0
  %132 = vmatpush1.msra.mxu0 %v61
  %133 = vmatprep.subr.mxu0 0.0
  %134 = vmatpush1.msra.mxu0 %v62
  %135 = vmatprep.subr.mxu0 0.0
  %136 = vmatpush1.msra.mxu0 %v63
  %137 = vmatprep.subr.mxu0 0.0
  %138 = vmatpush1.msra.mxu0 %v64
  %139 = vmatprep.subr.mxu0 0.0
  %140 = vmatpush1.msra.mxu0 0.0
  %141 = vmatprep.subr.mxu0 0.0
  %142 = vmatpush1.msra.mxu0 0.0
  %143 = vmatprep.subr.mxu0 0.0
  %144 = vmatpush1.msra.mxu0 0.0
  %145 = vmatprep.subr.mxu0 0.0
  %146 = vmatpush1.msra.mxu0 0.0
  %147 = vmatprep.subr.mxu0 0.0
  %148 = vmatpush1.msra.mxu0 0.0
  %149 = vmatprep.subr.mxu0 0.0
  %150 = vmatpush1.msra.mxu0 0.0
  %151 = vmatprep.subr.mxu0 0.0
  %152 = vmatpush1.msra.mxu0 0.0
  %153 = vmatprep.subr.mxu0 0.0
  %154 = vmatpush1.msra.mxu0 0.0
  %155 = vmatprep.subr.mxu0 0.0
  %156 = vmatpush1.msra.mxu0 0.0
  %157 = vmatprep.subr.mxu0 0.0
  %158 = vmatpush1.msra.mxu0 0.0
  %159 = vmatprep.subr.mxu0 0.0
  %160 = vmatpush1.msra.mxu0 0.0
  %161 = vmatprep.subr.mxu0 0.0
  %162 = vmatpush1.msra.mxu0 0.0
  %163 = vmatprep.subr.mxu0 0.0
  %164 = vmatpush1.msra.mxu0 0.0
  %165 = vmatprep.subr.mxu0 0.0
  %166 = vmatpush1.msra.mxu0 0.0
  %167 = vmatprep.subr.mxu0 0.0
  %168 = vmatpush1.msra.mxu0 0.0
  %169 = vmatprep.subr.mxu0 0.0
  %170 = vmatpush1.msra.mxu0 0.0
  %171 = vmatprep.subr.mxu0 0.0
  %172 = vmatpush1.msra.mxu0 0.0
  %173 = vmatprep.subr.mxu0 0.0
  %174 = vmatpush1.msra.mxu0 0.0
  %175 = vmatprep.subr.mxu0 0.0
  %176 = vmatpush1.msra.mxu0 0.0
  %177 = vmatprep.subr.mxu0 0.0
  %178 = vmatpush1.msra.mxu0 0.0
  %179 = vmatprep.subr.mxu0 0.0
  %180 = vmatpush1.msra.mxu0 0.0
  %181 = vmatprep.subr.mxu0 0.0
  %182 = vmatpush1.msra.mxu0 0.0
  %183 = vmatprep.subr.mxu0 0.0
  %184 = vmatpush1.msra.mxu0 0.0
  %185 = vmatprep.subr.mxu0 0.0
  %186 = vmatpush1.msra.mxu0 0.0
  %187 = vmatprep.subr.mxu0 0.0
  %188 = vmatpush1.msra.mxu0 0.0
  %189 = vmatprep.subr.mxu0 0.0
  %190 = vmatpush1.msra.mxu0 0.0
  %191 = vmatprep.subr.mxu0 0.0
  %192 = vmatpush1.msra.mxu0 0.0
  %193 = vmatprep.subr.mxu0 0.0
  %194 = vmatpush1.msra.mxu0 0.0
  %195 = vmatprep.mubr.f32.mxu0 0.0
  %196 = vmatmul.mubr.f32.gmra.mrb[0].mxu0 %v129
  %v197 = vpop.f32.mrb[0].mxu0
  %v198 = vadd.f32 %v70, %v197
  %v199 = vpop.f32.mrb[0].mxu0
  %200 = vdwg.mxu0
  %v201 = vmax.f32 %v198, 0.0
  %v202 = vld [vmem:[%s3] sm:$0x3]
  %v203 = vld [vmem:[%s4] sm:$0x1]
  %v205 = vlaneseq
  %v206 = vshrl.u32 %v205, 7
  %v207 = vsub.s32 0, %v206
  %v208 = vrot.slane %v203, %v207
  %vm210 = vcmask 15360
  %v212 = vsel %vm210, %v201, 0
  %vm214 = vcmask 1041408
  %v216 = vsel %vm214, %v202, 0
  %218 = vmatprep.subr.mxu0 0.0
  %219 = vmatpush1.msra.mxu0 %v216
  %220 = vmatprep.subr.mxu0 0.0
  %221 = vmatpush1.msra.mxu0 0.0
  %222 = vmatprep.subr.mxu0 0.0
  %223 = vmatpush1.msra.mxu0 0.0
  %224 = vmatprep.subr.mxu0 0.0
  %225 = vmatpush1.msra.mxu0 0.0
  %226 = vmatprep.subr.mxu0 0.0
  %227 = vmatpush1.msra.mxu0 0.0
  %228 = vmatprep.subr.mxu0 0.0
  %229 = vmatpush1.msra.mxu0 0.0
  %230 = vmatprep.subr.mxu0 0.0
  %231 = vmatpush1.msra.mxu0 0.0
  %232 = vmatprep.subr.mxu0 0.0
  %233 = vmatpush1.msra.mxu0 0.0
  %234 = vmatprep.subr.mxu0 0.0
  %235 = vmatpush1.msra.mxu0 0.0
  %236 = vmatprep.subr.mxu0 0.0
  %237 = vmatpush1.msra.mxu0 0.0
  %238 = vmatprep.subr.mxu0 0.0
  %239 = vmatpush1.msra.mxu0 0.0
  %240 = vmatprep.subr.mxu0 0.0
  %241 = vmatpush1.msra.mxu0 0.0
  %242 = vmatprep.subr.mxu0 0.0
  %243 = vmatpush1.msra.mxu0 0.0
  %244 = vmatprep.subr.mxu0 0.0
  %245 = vmatpush1.msra.mxu0 0.0
  %246 = vmatprep.subr.mxu0 0.0
  %247 = vmatpush1.msra.mxu0 0.0
  %248 = vmatprep.subr.mxu0 0.0
  %249 = vmatpush1.msra.mxu0 0.0
  %250 = vmatprep.subr.mxu0 0.0
  %251 = vmatpush1.msra.mxu0 0.0
  %252 = vmatprep.subr.mxu0 0.0
  %253 = vmatpush1.msra.mxu0 0.0
  %254 = vmatprep.subr.mxu0 0.0
  %255 = vmatpush1.msra.mxu0 0.0
  %256 = vmatprep.subr.mxu0 0.0
  %257 = vmatpush1.msra.mxu0 0.0
  %258 = vmatprep.subr.mxu0 0.0
  %259 = vmatpush1.msra.mxu0 0.0
  %260 = vmatprep.subr.mxu0 0.0
  %261 = vmatpush1.msra.mxu0 0.0
  %262 = vmatprep.subr.mxu0 0.0
  %263 = vmatpush1.msra.mxu0 0.0
  %264 = vmatprep.subr.mxu0 0.0
  %265 = vmatpush1.msra.mxu0 0.0
  %266 = vmatprep.subr.mxu0 0.0
  %267 = vmatpush1.msra.mxu0 0.0
  %268 = vmatprep.subr.mxu0 0.0
  %269 = vmatpush1.msra.mxu0 0.0
  %270 = vmatprep.subr.mxu0 0.0
  %271 = vmatpush1.msra.mxu0 0.0
  %272 = vmatprep.subr.mxu0 0.0
  %273 = vmatpush1.msra.mxu0 0.0
  %274 = vmatprep.subr.mxu0 0.0
  %275 = vmatpush1.msra.mxu0 0.0
  %276 = vmatprep.subr.mxu0 0.0
  %277 = vmatpush1.msra.mxu0 0.0
  %278 = vmatprep.subr.mxu0 0.0
  %279 = vmatpush1.msra.mxu0 0.0
  %280 = vmatprep.subr.mxu0 0.0
  %281 = vmatpush1.msra.mxu0 0.0
  %282 = vmatprep.mubr.f32.mxu0 0.0
  %283 = vmatmul.mubr.f32.gmra.mrb[0].mxu0 %v212
  %v284 = vpop.f32.mrb[0].mxu0
  %v285 = vadd.f32 %v208, %v284
  %v286 = vpop.f32.mrb[0].mxu0
  %287 = vdwg.mxu0
  %v288 = vxor.u32 %v285, 2147483648
  %v289 = vmul.f32 %v288, 1.442695
  %v290 = vpow.pop %v289
  %v291 = vadd.f32 %v290, 1.0
  %v292 = vrcp.pop %v291
  %v293 = vmul.f32 1.0, %v292
  %v294 = vlaneseq
  %v295 = vshrl.u32 %v294, 7
  %v296 = vsub.s32 0, %v295
  %v297 = vrot.slane %v293, %v296
  %299 = vbcast.lane.b32.xlu0 %v297, 256
  %v300 = vpop.permute.xlu0 %299
  %s302 = sor.u32 256, 8
  %303 = vbcast.lane.b32.xlu0 %v297, %s302
  %v304 = vpop.permute.xlu0 %303
  %s306 = sor.u32 256, 16
  %307 = vbcast.lane.b32.xlu0 %v297, %s306
  %v308 = vpop.permute.xlu0 %307
  %s310 = sor.u32 256, 24
  %311 = vbcast.lane.b32.xlu0 %v297, %s310
  %v312 = vpop.permute.xlu0 %311
  %v313 = vlaneseq
  %v314 = vshrl.u32 %v313, 7
  %v315 = vsub.s32 1, %v314
  %v316 = vrot.slane %v293, %v315
  %318 = vbcast.lane.b32.xlu0 %v316, 256
  %v319 = vpop.permute.xlu0 %318
  %s321 = sor.u32 256, 8
  %322 = vbcast.lane.b32.xlu0 %v316, %s321
  %v323 = vpop.permute.xlu0 %322
  %s325 = sor.u32 256, 16
  %326 = vbcast.lane.b32.xlu0 %v316, %s325
  %v327 = vpop.permute.xlu0 %326
  %s329 = sor.u32 256, 24
  %330 = vbcast.lane.b32.xlu0 %v316, %s329
  %v331 = vpop.permute.xlu0 %330
  %v332 = vmul.f32 %v20, %v300
  %v333 = vmul.f32 %v21, %v304
  %v334 = vmul.f32 %v22, %v308
  %v335 = vmul.f32 %v23, %v312
  %v336 = vmul.f32 %v24, %v319
  %v337 = vmul.f32 %v25, %v323
  %v338 = vmul.f32 %v26, %v327
  %v339 = vmul.f32 %v27, %v331
  %340 = vst.msk [vmem:[%s5] sm:$0xff] %vm28, %v332
  %341 = vst.msk [vmem:[%s5 + $0x8] sm:$0xff] %vm28, %v333
  %342 = vst.msk [vmem:[%s5 + $0x10] sm:$0xff] %vm28, %v334
  %343 = vst.msk [vmem:[%s5 + $0x18] sm:$0xff] %vm28, %v335
  %344 = vst.msk [vmem:[%s5 + $0x20] sm:$0xff] %vm28, %v336
  %345 = vst.msk [vmem:[%s5 + $0x28] sm:$0xff] %vm28, %v337
  %346 = vst.msk [vmem:[%s5 + $0x30] sm:$0xff] %vm28, %v338
  %347 = vst.msk [vmem:[%s5 + $0x38] sm:$0xff] %vm28, %v339
  // Predicated region
  $region22: #{tpu_custom_call.1} parent=0 // pred_check
    _
  $region23: #{tpu_custom_call.1} parent=0 // pred_check_branch
    %349 = sbr.rel (0) target = $region25
  $region24: #{tpu_custom_call.1} parent=0 // pred_region
    _
  $region25: #{tpu_custom_call.1} parent=0 // pred_fallthru
    _
  // Predicated region
  $region26: #{tpu_custom_call.1} parent=0 // pred_check
    _
  $region27: #{tpu_custom_call.1} parent=0 // pred_check_branch
    %351 = sbr.rel (0) target = $region29
  $region28: #{tpu_custom_call.1} parent=0 // pred_region
    _
  $region29: #{tpu_custom_call.1} parent=0 // pred_fallthru
    _

</llo_original>
